<compile_context>
chip_gen: v5e
topology: v5e:2x2
jax: 0.10.0
libtpu: 0.0.40
codegen_flags: <defaults>
</compile_context>

<pallas_src>
import jax
import jax.numpy as jnp
from jax.experimental import pallas as pl
from jax.experimental.pallas import tpu as pltpu

_SUBLANE = 8
_LANE = 128


def _round_up(n: int, m: int) -> int:
    return ((n + m - 1) // m) * m


# ----------------------------------------------------------------------------
# Fused Pallas kernel: LSTM recurrence + MLP value head
# ----------------------------------------------------------------------------
def lstm_value_kernel(x_ref, wih_ref, whh_ref, b_ref,
                      w1_ref, b1_ref, w2_ref, b2_ref,
                      w3_ref, b3_ref, w4_ref, b4_ref,
                      out_ref):
    """Fused single-layer LSTM (h0=c0=0) + 4-layer value MLP.

    x_ref:   (T*Bp, D) time-major, batch zero-padded to Bp (sublane multiple)
    wih_ref: (D, 4H)  = W_ih^T      whh_ref: (H, 4H) = W_hh^T
    b_ref:   (1, 4H)  = b_ih + b_hh
      (i/f/o gate columns of wih/whh/b are pre-scaled by 0.5 so that a single
       tanh implements all gate nonlinearities: sigmoid(x) = 0.5*tanh(x/2)+0.5)
    w1..w4 / b1..b4: MLP weights in (in, out) layout; the final layer is
      zero-padded to the slab width with the scalar value in column 2H.
    out_ref: (Bp, W) packed output slab: h in [0,H), c in [H,2H), value at 2H.
    """
    Bp, _ = out_ref.shape
    H = whh_ref.shape[0]
    T = x_ref.shape[0] // Bp

    # Hoisted input projection: one matmul for all timesteps, bias folded in.
    gates_x = (jnp.dot(x_ref[...], wih_ref[...],
                       preferred_element_type=jnp.float32)
               + b_ref[...])                                    # (T*Bp, 4H)

    whh = whh_ref[...]                                          # (H, 4H)

    h = jnp.zeros((Bp, H), jnp.float32)
    c = jnp.zeros((Bp, H), jnp.float32)

    # Fully unrolled recurrence: only h @ W_hh + gate math sit on the serial
    # chain.  (For large T switch to lax.fori_loop(..., unroll=2..4).)
    for t in range(T):
        # Sublane-aligned whole-tile slice thanks to the batch padding.
        gates = gates_x[t * Bp:(t + 1) * Bp, :] + jnp.dot(
            h, whh, preferred_element_type=jnp.float32)         # (Bp, 4H)
        # Single EUP pass over all 4H lanes; i/f/o columns were pre-scaled by
        # 0.5 outside the kernel, so 0.5*tanh(.)+0.5 == sigmoid of raw gates.
        tg = jnp.tanh(gates)
        i_g = 0.5 * tg[:, 0 * H:1 * H] + 0.5
        f_g = 0.5 * tg[:, 1 * H:2 * H] + 0.5
        g_g = tg[:, 2 * H:3 * H]
        o_g = 0.5 * tg[:, 3 * H:4 * H] + 0.5
        c = f_g * c + i_g * g_g
        h = o_g * jnp.tanh(c)                                   # 2nd EUP pass

    # Fused MLP value-head epilogue (h stays in VMEM/vregs, no relaunch).
    z = jnp.maximum(
        jnp.dot(h, w1_ref[...], preferred_element_type=jnp.float32) + b1_ref[...],
        0.0)
    z = jnp.maximum(
        jnp.dot(z, w2_ref[...], preferred_element_type=jnp.float32) + b2_ref[...],
        0.0)
    z = jnp.maximum(
        jnp.dot(z, w3_ref[...], preferred_element_type=jnp.float32) + b3_ref[...],
        0.0)
    val = (jnp.dot(z, w4_ref[...], preferred_element_type=jnp.float32)
           + b4_ref[...])                                       # (Bp, W), value at col 2H

    # Packed lane-dense output: one full-width store, then overwrite the
    # (zero) leading columns with h and c.  Single HBM writeback.
    out_ref[...] = val
    out_ref[:, 0:H] = h
    out_ref[:, H:2 * H] = c


# ----------------------------------------------------------------------------
# Wrapper
# ----------------------------------------------------------------------------
_VMEM = pl.BlockSpec(memory_space=pltpu.MemorySpace.VMEM)


@jax.jit
def lstm_value_forward(x, kparams):
    """Forward pass of LSTMValueNetwork (hidden=None path, matching init_hidden).

    x: (B, T, D) or (B, D).  Returns (value (B,), (h_n (1,B,H), c_n (1,B,H))).
    """
    # TODO(synk): externally supplied (h0, c0) hidden state is not plumbed in;
    # this implements the hidden=None / init_hidden (zeros) path of forward().
    if x.ndim == 2:
        x = x[:, None, :]                          # unsqueeze(1), like PyTorch
    B, T, D = x.shape
    H = kparams["whh_t"].shape[0]
    W = kparams["mlp"][3][0].shape[1]
    Bp = _round_up(B, _SUBLANE)

    # Single fused host-side prep: the (required) batch pad to a sublane
    # multiple and the time-major flatten in one expression -> one XLA fusion.
    x_tm = jnp.swapaxes(x, 0, 1)                               # (T, B, D)
    x_tm = jnp.pad(x_tm, ((0, 0), (0, Bp - B), (0, 0)))        # (T, Bp, D)
    x_tm = x_tm.reshape(T * Bp, D)

    (w1, b1), (w2, b2), (w3, b3), (w4, b4) = kparams["mlp"]

    slab = pl.pallas_call(
        lstm_value_kernel,
        out_shape=jax.ShapeDtypeStruct((Bp, W), jnp.float32),
        in_specs=[_VMEM] * 12,
        out_specs=_VMEM,
    )(x_tm, kparams["wih_t"], kparams["whh_t"], kparams["b_lstm"],
      w1, b1, w2, b2, w3, b3, w4, b4)

    # Padded batch rows compute garbage-but-finite values; slice them away.
    value = slab[:B, 2 * H]                        # .squeeze(-1) -> (B,)
    h_n = slab[:B, 0:H][None, :, :]
    c_n = slab[:B, H:2 * H][None, :, :]
    return value, (h_n, c_n)


# ----------------------------------------------------------------------------
# Deterministic parameter construction (synthetic, PyTorch layout/semantics)
# ----------------------------------------------------------------------------
def make_params(key, obs_dim, hidden_size, lstm_hidden_size):
    ks = jax.random.split(key, 12)
    H = lstm_hidden_size

    def uni(k, shape, fan):
        bound = 1.0 / float(fan) ** 0.5
        return jax.random.uniform(k, shape, jnp.float32, -bound, bound)

    # LSTM (PyTorch stores W_ih (4H, D), W_hh (4H, H); gate order [i, f, g, o]).
    w_ih = uni(ks[0], (4 * H, obs_dim), H)
    w_hh = uni(ks[1], (4 * H, H), H)
    b_ih = uni(ks[2], (4 * H,), H)
    b_hh = uni(ks[3], (4 * H,), H)

    def linear(kw, kb, fan_in, fan_out):           # PyTorch layout (out, in)
        return uni(kw, (fan_out, fan_in), fan_in), uni(kb, (fan_out,), fan_in)

    mlp = [linear(ks[4], ks[5], H, hidden_size),
           linear(ks[6], ks[7], hidden_size, hidden_size * 2),
           linear(ks[8], ks[9], hidden_size * 2, hidden_size),
           linear(ks[10], ks[11], hidden_size, 1)]

    return {"w_ih": w_ih, "w_hh": w_hh, "b_ih": b_ih, "b_hh": b_hh, "mlp": mlp}


def pack_kernel_params(params):
    """Convert PyTorch-layout params to the kernel layout.

    * transposes weights to (in, out),
    * folds the two LSTM biases,
    * pre-scales the i/f/o gate columns by 0.5 (tanh-identity sigmoid),
    * zero-pads the scalar value head into a lane-dense slab column 2H.
    """
    H = params["w_hh"].shape[1]
    scale = jnp.concatenate([jnp.full((H,), 0.5), jnp.full((H,), 0.5),
                             jnp.ones((H,)), jnp.full((H,), 0.5)]
                            ).astype(jnp.float32)               # [i, f, g, o]

    wih_t = params["w_ih"].T * scale[None, :]                   # (D, 4H)
    whh_t = params["w_hh"].T * scale[None, :]                   # (H, 4H)
    b_lstm = ((params["b_ih"] + params["b_hh"]) * scale)[None, :]

    def to_kernel(w, b):
        return w.T, b[None, :]                                  # (in, out), (1, out)

    (w1, b1), (w2, b2), (w3, b3), (w4, b4) = params["mlp"]
    l1 = to_kernel(w1, b1)
    l2 = to_kernel(w2, b2)
    l3 = to_kernel(w3, b3)
    w4_t, b4_r = to_kernel(w4, b4)                              # (hid, 1), (1, 1)

    W = _round_up(2 * H + 1, _LANE)
    col = 2 * H
    w4p = jnp.zeros((w4_t.shape[0], W), jnp.float32).at[:, col:col + 1].set(w4_t)
    b4p = jnp.zeros((1, W), jnp.float32).at[:, col:col + 1].set(b4_r)

    return {"wih_t": wih_t, "whh_t": whh_t, "b_lstm": b_lstm,
            "mlp": (l1, l2, l3, (w4p, b4p))}


# ----------------------------------------------------------------------------
# Pure-JAX reference (exact PyTorch math, independent of kernel tricks)
# ----------------------------------------------------------------------------
def reference_forward(x, params):
    if x.ndim == 2:
        x = x[:, None, :]
    B, T, _ = x.shape
    H = params["w_hh"].shape[1]
    wih_t = params["w_ih"].T
    whh_t = params["w_hh"].T
    b = params["b_ih"] + params["b_hh"]
    h = jnp.zeros((B, H), jnp.float32)
    c = jnp.zeros((B, H), jnp.float32)
    for t in range(T):
        gates = x[:, t, :] @ wih_t + h @ whh_t + b
        i_g = jax.nn.sigmoid(gates[:, 0 * H:1 * H])
        f_g = jax.nn.sigmoid(gates[:, 1 * H:2 * H])
        g_g = jnp.tanh(gates[:, 2 * H:3 * H])
        o_g = jax.nn.sigmoid(gates[:, 3 * H:4 * H])
        c = f_g * c + i_g * g_g
        h = o_g * jnp.tanh(c)
    feat = h
    for k, (w, bb) in enumerate(params["mlp"]):
        feat = feat @ w.T + bb
        if k < 3:
            feat = jnp.maximum(feat, 0.0)
    return feat[:, 0], (h[None], c[None])


# ----------------------------------------------------------------------------
if __name__ == "__main__":
    # Small shapes consistent with the module: obs_dim=16 -> LSTM(H=32) -> MLP -> 1
    B, T, OBS_DIM = 2, 8, 16
    HIDDEN, LSTM_HIDDEN = 32, 32

    key = jax.random.PRNGKey(0)
    k_param, k_x = jax.random.split(key)
    params = make_params(k_param, OBS_DIM, HIDDEN, LSTM_HIDDEN)
    kparams = pack_kernel_params(params)
    x = jax.random.normal(k_x, (B, T, OBS_DIM), jnp.float32)

    value, (h_n, c_n) = lstm_value_forward(x, kparams)
    jax.block_until_ready((value, h_n, c_n))

    ref_value, (ref_h, ref_c) = reference_forward(x, params)
    assert value.shape == (B,)
    assert h_n.shape == (1, B, LSTM_HIDDEN) and c_n.shape == (1, B, LSTM_HIDDEN)
    assert jnp.allclose(value, ref_value, atol=1e-4, rtol=1e-4)
    assert jnp.allclose(h_n, ref_h, atol=1e-4, rtol=1e-4)
    assert jnp.allclose(c_n, ref_c, atol=1e-4, rtol=1e-4)

    print("KERNEL_OK")
</pallas_src>

<mosaic_0001>
module attributes {stable_mosaic.version = 11 : i64} {
  func.func @lstm_value_kernel(%arg0: memref<64x16xf32, #tpu.memory_space<vmem>>, %arg1: memref<16x128xf32, #tpu.memory_space<vmem>>, %arg2: memref<32x128xf32, #tpu.memory_space<vmem>>, %arg3: memref<1x128xf32, #tpu.memory_space<vmem>>, %arg4: memref<32x32xf32, #tpu.memory_space<vmem>>, %arg5: memref<1x32xf32, #tpu.memory_space<vmem>>, %arg6: memref<32x64xf32, #tpu.memory_space<vmem>>, %arg7: memref<1x64xf32, #tpu.memory_space<vmem>>, %arg8: memref<64x32xf32, #tpu.memory_space<vmem>>, %arg9: memref<1x32xf32, #tpu.memory_space<vmem>>, %arg10: memref<32x128xf32, #tpu.memory_space<vmem>>, %arg11: memref<1x128xf32, #tpu.memory_space<vmem>>, %arg12: memref<8x128xf32, #tpu.memory_space<vmem>>) attributes {dimension_semantics = [], scalar_prefetch = 0 : i64, scratch_operands = 0 : i64, tpu.core_type = #tpu.core_type<tc>} {
    %c0 = arith.constant 0 : index
    %c0_0 = arith.constant 0 : index
    %0 = vector.load %arg0[%c0, %c0_0] : memref<64x16xf32, #tpu.memory_space<vmem>>, vector<64x16xf32>
    %c0_1 = arith.constant 0 : index
    %c0_2 = arith.constant 0 : index
    %1 = vector.load %arg1[%c0_1, %c0_2] : memref<16x128xf32, #tpu.memory_space<vmem>>, vector<16x128xf32>
    %cst = arith.constant dense<0.000000e+00> : vector<64x128xf32>
    %2 = tpu.matmul %0, %1, %cst {dimension_numbers = #tpu.dot_dimension_numbers<[1], [0], [0], [1], [0, 0, 1, 1], [], []>} : vector<64x16xf32>, vector<16x128xf32>, vector<64x128xf32> -> vector<64x128xf32>
    %c0_3 = arith.constant 0 : index
    %c0_4 = arith.constant 0 : index
    %3 = vector.load %arg3[%c0_3, %c0_4] : memref<1x128xf32, #tpu.memory_space<vmem>>, vector<1x128xf32>
    %4 = vector.broadcast %3 : vector<1x128xf32> to vector<64x128xf32>
    %5 = arith.addf %2, %4 : vector<64x128xf32>
    %c0_5 = arith.constant 0 : index
    %c0_6 = arith.constant 0 : index
    %6 = vector.load %arg2[%c0_5, %c0_6] : memref<32x128xf32, #tpu.memory_space<vmem>>, vector<32x128xf32>
    %cst_7 = arith.constant 0.000000e+00 : f32
    %7 = vector.broadcast %cst_7 : f32 to vector<8x32xf32>
    %cst_8 = arith.constant 0.000000e+00 : f32
    %8 = vector.broadcast %cst_8 : f32 to vector<8x32xf32>
    %9 = vector.extract_strided_slice %5 {offsets = [0, 0], sizes = [8, 128], strides = [1, 1]} : vector<64x128xf32> to vector<8x128xf32>
    %cst_9 = arith.constant dense<0.000000e+00> : vector<8x128xf32>
    %10 = tpu.matmul %7, %6, %cst_9 {dimension_numbers = #tpu.dot_dimension_numbers<[1], [0], [0], [1], [0, 0, 1, 1], [], []>} : vector<8x32xf32>, vector<32x128xf32>, vector<8x128xf32> -> vector<8x128xf32>
    %11 = arith.addf %9, %10 : vector<8x128xf32>
    %12 = math.tanh %11 : vector<8x128xf32>
    %13 = vector.extract_strided_slice %12 {offsets = [0, 0], sizes = [8, 32], strides = [1, 1]} : vector<8x128xf32> to vector<8x32xf32>
    %cst_10 = arith.constant 5.000000e-01 : f32
    %14 = vector.broadcast %cst_10 : f32 to vector<8x32xf32>
    %15 = arith.mulf %14, %13 : vector<8x32xf32>
    %cst_11 = arith.constant 5.000000e-01 : f32
    %16 = vector.broadcast %cst_11 : f32 to vector<8x32xf32>
    %17 = arith.addf %15, %16 : vector<8x32xf32>
    %18 = vector.extract_strided_slice %12 {offsets = [0, 32], sizes = [8, 32], strides = [1, 1]} : vector<8x128xf32> to vector<8x32xf32>
    %cst_12 = arith.constant 5.000000e-01 : f32
    %19 = vector.broadcast %cst_12 : f32 to vector<8x32xf32>
    %20 = arith.mulf %19, %18 : vector<8x32xf32>
    %cst_13 = arith.constant 5.000000e-01 : f32
    %21 = vector.broadcast %cst_13 : f32 to vector<8x32xf32>
    %22 = arith.addf %20, %21 : vector<8x32xf32>
    %23 = vector.extract_strided_slice %12 {offsets = [0, 64], sizes = [8, 32], strides = [1, 1]} : vector<8x128xf32> to vector<8x32xf32>
    %24 = vector.extract_strided_slice %12 {offsets = [0, 96], sizes = [8, 32], strides = [1, 1]} : vector<8x128xf32> to vector<8x32xf32>
    %cst_14 = arith.constant 5.000000e-01 : f32
    %25 = vector.broadcast %cst_14 : f32 to vector<8x32xf32>
    %26 = arith.mulf %25, %24 : vector<8x32xf32>
    %cst_15 = arith.constant 5.000000e-01 : f32
    %27 = vector.broadcast %cst_15 : f32 to vector<8x32xf32>
    %28 = arith.addf %26, %27 : vector<8x32xf32>
    %29 = arith.mulf %22, %8 : vector<8x32xf32>
    %30 = arith.mulf %17, %23 : vector<8x32xf32>
    %31 = arith.addf %29, %30 : vector<8x32xf32>
    %32 = math.tanh %31 : vector<8x32xf32>
    %33 = arith.mulf %28, %32 : vector<8x32xf32>
    %34 = vector.extract_strided_slice %5 {offsets = [8, 0], sizes = [8, 128], strides = [1, 1]} : vector<64x128xf32> to vector<8x128xf32>
    %cst_16 = arith.constant dense<0.000000e+00> : vector<8x128xf32>
    %35 = tpu.matmul %33, %6, %cst_16 {dimension_numbers = #tpu.dot_dimension_numbers<[1], [0], [0], [1], [0, 0, 1, 1], [], []>} : vector<8x32xf32>, vector<32x128xf32>, vector<8x128xf32> -> vector<8x128xf32>
    %36 = arith.addf %34, %35 : vector<8x128xf32>
    %37 = math.tanh %36 : vector<8x128xf32>
    %38 = vector.extract_strided_slice %37 {offsets = [0, 0], sizes = [8, 32], strides = [1, 1]} : vector<8x128xf32> to vector<8x32xf32>
    %cst_17 = arith.constant 5.000000e-01 : f32
    %39 = vector.broadcast %cst_17 : f32 to vector<8x32xf32>
    %40 = arith.mulf %39, %38 : vector<8x32xf32>
    %cst_18 = arith.constant 5.000000e-01 : f32
    %41 = vector.broadcast %cst_18 : f32 to vector<8x32xf32>
    %42 = arith.addf %40, %41 : vector<8x32xf32>
    %43 = vector.extract_strided_slice %37 {offsets = [0, 32], sizes = [8, 32], strides = [1, 1]} : vector<8x128xf32> to vector<8x32xf32>
    %cst_19 = arith.constant 5.000000e-01 : f32
    %44 = vector.broadcast %cst_19 : f32 to vector<8x32xf32>
    %45 = arith.mulf %44, %43 : vector<8x32xf32>
    %cst_20 = arith.constant 5.000000e-01 : f32
    %46 = vector.broadcast %cst_20 : f32 to vector<8x32xf32>
    %47 = arith.addf %45, %46 : vector<8x32xf32>
    %48 = vector.extract_strided_slice %37 {offsets = [0, 64], sizes = [8, 32], strides = [1, 1]} : vector<8x128xf32> to vector<8x32xf32>
    %49 = vector.extract_strided_slice %37 {offsets = [0, 96], sizes = [8, 32], strides = [1, 1]} : vector<8x128xf32> to vector<8x32xf32>
    %cst_21 = arith.constant 5.000000e-01 : f32
    %50 = vector.broadcast %cst_21 : f32 to vector<8x32xf32>
    %51 = arith.mulf %50, %49 : vector<8x32xf32>
    %cst_22 = arith.constant 5.000000e-01 : f32
    %52 = vector.broadcast %cst_22 : f32 to vector<8x32xf32>
    %53 = arith.addf %51, %52 : vector<8x32xf32>
    %54 = arith.mulf %47, %31 : vector<8x32xf32>
    %55 = arith.mulf %42, %48 : vector<8x32xf32>
    %56 = arith.addf %54, %55 : vector<8x32xf32>
    %57 = math.tanh %56 : vector<8x32xf32>
    %58 = arith.mulf %53, %57 : vector<8x32xf32>
    %59 = vector.extract_strided_slice %5 {offsets = [16, 0], sizes = [8, 128], strides = [1, 1]} : vector<64x128xf32> to vector<8x128xf32>
    %cst_23 = arith.constant dense<0.000000e+00> : vector<8x128xf32>
    %60 = tpu.matmul %58, %6, %cst_23 {dimension_numbers = #tpu.dot_dimension_numbers<[1], [0], [0], [1], [0, 0, 1, 1], [], []>} : vector<8x32xf32>, vector<32x128xf32>, vector<8x128xf32> -> vector<8x128xf32>
    %61 = arith.addf %59, %60 : vector<8x128xf32>
    %62 = math.tanh %61 : vector<8x128xf32>
    %63 = vector.extract_strided_slice %62 {offsets = [0, 0], sizes = [8, 32], strides = [1, 1]} : vector<8x128xf32> to vector<8x32xf32>
    %cst_24 = arith.constant 5.000000e-01 : f32
    %64 = vector.broadcast %cst_24 : f32 to vector<8x32xf32>
    %65 = arith.mulf %64, %63 : vector<8x32xf32>
    %cst_25 = arith.constant 5.000000e-01 : f32
    %66 = vector.broadcast %cst_25 : f32 to vector<8x32xf32>
    %67 = arith.addf %65, %66 : vector<8x32xf32>
    %68 = vector.extract_strided_slice %62 {offsets = [0, 32], sizes = [8, 32], strides = [1, 1]} : vector<8x128xf32> to vector<8x32xf32>
    %cst_26 = arith.constant 5.000000e-01 : f32
    %69 = vector.broadcast %cst_26 : f32 to vector<8x32xf32>
    %70 = arith.mulf %69, %68 : vector<8x32xf32>
    %cst_27 = arith.constant 5.000000e-01 : f32
    %71 = vector.broadcast %cst_27 : f32 to vector<8x32xf32>
    %72 = arith.addf %70, %71 : vector<8x32xf32>
    %73 = vector.extract_strided_slice %62 {offsets = [0, 64], sizes = [8, 32], strides = [1, 1]} : vector<8x128xf32> to vector<8x32xf32>
    %74 = vector.extract_strided_slice %62 {offsets = [0, 96], sizes = [8, 32], strides = [1, 1]} : vector<8x128xf32> to vector<8x32xf32>
    %cst_28 = arith.constant 5.000000e-01 : f32
    %75 = vector.broadcast %cst_28 : f32 to vector<8x32xf32>
    %76 = arith.mulf %75, %74 : vector<8x32xf32>
    %cst_29 = arith.constant 5.000000e-01 : f32
    %77 = vector.broadcast %cst_29 : f32 to vector<8x32xf32>
    %78 = arith.addf %76, %77 : vector<8x32xf32>
    %79 = arith.mulf %72, %56 : vector<8x32xf32>
    %80 = arith.mulf %67, %73 : vector<8x32xf32>
    %81 = arith.addf %79, %80 : vector<8x32xf32>
    %82 = math.tanh %81 : vector<8x32xf32>
    %83 = arith.mulf %78, %82 : vector<8x32xf32>
    %84 = vector.extract_strided_slice %5 {offsets = [24, 0], sizes = [8, 128], strides = [1, 1]} : vector<64x128xf32> to vector<8x128xf32>
    %cst_30 = arith.constant dense<0.000000e+00> : vector<8x128xf32>
    %85 = tpu.matmul %83, %6, %cst_30 {dimension_numbers = #tpu.dot_dimension_numbers<[1], [0], [0], [1], [0, 0, 1, 1], [], []>} : vector<8x32xf32>, vector<32x128xf32>, vector<8x128xf32> -> vector<8x128xf32>
    %86 = arith.addf %84, %85 : vector<8x128xf32>
    %87 = math.tanh %86 : vector<8x128xf32>
    %88 = vector.extract_strided_slice %87 {offsets = [0, 0], sizes = [8, 32], strides = [1, 1]} : vector<8x128xf32> to vector<8x32xf32>
    %cst_31 = arith.constant 5.000000e-01 : f32
    %89 = vector.broadcast %cst_31 : f32 to vector<8x32xf32>
    %90 = arith.mulf %89, %88 : vector<8x32xf32>
    %cst_32 = arith.constant 5.000000e-01 : f32
    %91 = vector.broadcast %cst_32 : f32 to vector<8x32xf32>
    %92 = arith.addf %90, %91 : vector<8x32xf32>
    %93 = vector.extract_strided_slice %87 {offsets = [0, 32], sizes = [8, 32], strides = [1, 1]} : vector<8x128xf32> to vector<8x32xf32>
    %cst_33 = arith.constant 5.000000e-01 : f32
    %94 = vector.broadcast %cst_33 : f32 to vector<8x32xf32>
    %95 = arith.mulf %94, %93 : vector<8x32xf32>
    %cst_34 = arith.constant 5.000000e-01 : f32
    %96 = vector.broadcast %cst_34 : f32 to vector<8x32xf32>
    %97 = arith.addf %95, %96 : vector<8x32xf32>
    %98 = vector.extract_strided_slice %87 {offsets = [0, 64], sizes = [8, 32], strides = [1, 1]} : vector<8x128xf32> to vector<8x32xf32>
    %99 = vector.extract_strided_slice %87 {offsets = [0, 96], sizes = [8, 32], strides = [1, 1]} : vector<8x128xf32> to vector<8x32xf32>
    %cst_35 = arith.constant 5.000000e-01 : f32
    %100 = vector.broadcast %cst_35 : f32 to vector<8x32xf32>
    %101 = arith.mulf %100, %99 : vector<8x32xf32>
    %cst_36 = arith.constant 5.000000e-01 : f32
    %102 = vector.broadcast %cst_36 : f32 to vector<8x32xf32>
    %103 = arith.addf %101, %102 : vector<8x32xf32>
    %104 = arith.mulf %97, %81 : vector<8x32xf32>
    %105 = arith.mulf %92, %98 : vector<8x32xf32>
    %106 = arith.addf %104, %105 : vector<8x32xf32>
    %107 = math.tanh %106 : vector<8x32xf32>
    %108 = arith.mulf %103, %107 : vector<8x32xf32>
    %109 = vector.extract_strided_slice %5 {offsets = [32, 0], sizes = [8, 128], strides = [1, 1]} : vector<64x128xf32> to vector<8x128xf32>
    %cst_37 = arith.constant dense<0.000000e+00> : vector<8x128xf32>
    %110 = tpu.matmul %108, %6, %cst_37 {dimension_numbers = #tpu.dot_dimension_numbers<[1], [0], [0], [1], [0, 0, 1, 1], [], []>} : vector<8x32xf32>, vector<32x128xf32>, vector<8x128xf32> -> vector<8x128xf32>
    %111 = arith.addf %109, %110 : vector<8x128xf32>
    %112 = math.tanh %111 : vector<8x128xf32>
    %113 = vector.extract_strided_slice %112 {offsets = [0, 0], sizes = [8, 32], strides = [1, 1]} : vector<8x128xf32> to vector<8x32xf32>
    %cst_38 = arith.constant 5.000000e-01 : f32
    %114 = vector.broadcast %cst_38 : f32 to vector<8x32xf32>
    %115 = arith.mulf %114, %113 : vector<8x32xf32>
    %cst_39 = arith.constant 5.000000e-01 : f32
    %116 = vector.broadcast %cst_39 : f32 to vector<8x32xf32>
    %117 = arith.addf %115, %116 : vector<8x32xf32>
    %118 = vector.extract_strided_slice %112 {offsets = [0, 32], sizes = [8, 32], strides = [1, 1]} : vector<8x128xf32> to vector<8x32xf32>
    %cst_40 = arith.constant 5.000000e-01 : f32
    %119 = vector.broadcast %cst_40 : f32 to vector<8x32xf32>
    %120 = arith.mulf %119, %118 : vector<8x32xf32>
    %cst_41 = arith.constant 5.000000e-01 : f32
    %121 = vector.broadcast %cst_41 : f32 to vector<8x32xf32>
    %122 = arith.addf %120, %121 : vector<8x32xf32>
    %123 = vector.extract_strided_slice %112 {offsets = [0, 64], sizes = [8, 32], strides = [1, 1]} : vector<8x128xf32> to vector<8x32xf32>
    %124 = vector.extract_strided_slice %112 {offsets = [0, 96], sizes = [8, 32], strides = [1, 1]} : vector<8x128xf32> to vector<8x32xf32>
    %cst_42 = arith.constant 5.000000e-01 : f32
    %125 = vector.broadcast %cst_42 : f32 to vector<8x32xf32>
    %126 = arith.mulf %125, %124 : vector<8x32xf32>
    %cst_43 = arith.constant 5.000000e-01 : f32
    %127 = vector.broadcast %cst_43 : f32 to vector<8x32xf32>
    %128 = arith.addf %126, %127 : vector<8x32xf32>
    %129 = arith.mulf %122, %106 : vector<8x32xf32>
    %130 = arith.mulf %117, %123 : vector<8x32xf32>
    %131 = arith.addf %129, %130 : vector<8x32xf32>
    %132 = math.tanh %131 : vector<8x32xf32>
    %133 = arith.mulf %128, %132 : vector<8x32xf32>
    %134 = vector.extract_strided_slice %5 {offsets = [40, 0], sizes = [8, 128], strides = [1, 1]} : vector<64x128xf32> to vector<8x128xf32>
    %cst_44 = arith.constant dense<0.000000e+00> : vector<8x128xf32>
    %135 = tpu.matmul %133, %6, %cst_44 {dimension_numbers = #tpu.dot_dimension_numbers<[1], [0], [0], [1], [0, 0, 1, 1], [], []>} : vector<8x32xf32>, vector<32x128xf32>, vector<8x128xf32> -> vector<8x128xf32>
    %136 = arith.addf %134, %135 : vector<8x128xf32>
    %137 = math.tanh %136 : vector<8x128xf32>
    %138 = vector.extract_strided_slice %137 {offsets = [0, 0], sizes = [8, 32], strides = [1, 1]} : vector<8x128xf32> to vector<8x32xf32>
    %cst_45 = arith.constant 5.000000e-01 : f32
    %139 = vector.broadcast %cst_45 : f32 to vector<8x32xf32>
    %140 = arith.mulf %139, %138 : vector<8x32xf32>
    %cst_46 = arith.constant 5.000000e-01 : f32
    %141 = vector.broadcast %cst_46 : f32 to vector<8x32xf32>
    %142 = arith.addf %140, %141 : vector<8x32xf32>
    %143 = vector.extract_strided_slice %137 {offsets = [0, 32], sizes = [8, 32], strides = [1, 1]} : vector<8x128xf32> to vector<8x32xf32>
    %cst_47 = arith.constant 5.000000e-01 : f32
    %144 = vector.broadcast %cst_47 : f32 to vector<8x32xf32>
    %145 = arith.mulf %144, %143 : vector<8x32xf32>
    %cst_48 = arith.constant 5.000000e-01 : f32
    %146 = vector.broadcast %cst_48 : f32 to vector<8x32xf32>
    %147 = arith.addf %145, %146 : vector<8x32xf32>
    %148 = vector.extract_strided_slice %137 {offsets = [0, 64], sizes = [8, 32], strides = [1, 1]} : vector<8x128xf32> to vector<8x32xf32>
    %149 = vector.extract_strided_slice %137 {offsets = [0, 96], sizes = [8, 32], strides = [1, 1]} : vector<8x128xf32> to vector<8x32xf32>
    %cst_49 = arith.constant 5.000000e-01 : f32
    %150 = vector.broadcast %cst_49 : f32 to vector<8x32xf32>
    %151 = arith.mulf %150, %149 : vector<8x32xf32>
    %cst_50 = arith.constant 5.000000e-01 : f32
    %152 = vector.broadcast %cst_50 : f32 to vector<8x32xf32>
    %153 = arith.addf %151, %152 : vector<8x32xf32>
    %154 = arith.mulf %147, %131 : vector<8x32xf32>
    %155 = arith.mulf %142, %148 : vector<8x32xf32>
    %156 = arith.addf %154, %155 : vector<8x32xf32>
    %157 = math.tanh %156 : vector<8x32xf32>
    %158 = arith.mulf %153, %157 : vector<8x32xf32>
    %159 = vector.extract_strided_slice %5 {offsets = [48, 0], sizes = [8, 128], strides = [1, 1]} : vector<64x128xf32> to vector<8x128xf32>
    %cst_51 = arith.constant dense<0.000000e+00> : vector<8x128xf32>
    %160 = tpu.matmul %158, %6, %cst_51 {dimension_numbers = #tpu.dot_dimension_numbers<[1], [0], [0], [1], [0, 0, 1, 1], [], []>} : vector<8x32xf32>, vector<32x128xf32>, vector<8x128xf32> -> vector<8x128xf32>
    %161 = arith.addf %159, %160 : vector<8x128xf32>
    %162 = math.tanh %161 : vector<8x128xf32>
    %163 = vector.extract_strided_slice %162 {offsets = [0, 0], sizes = [8, 32], strides = [1, 1]} : vector<8x128xf32> to vector<8x32xf32>
    %cst_52 = arith.constant 5.000000e-01 : f32
    %164 = vector.broadcast %cst_52 : f32 to vector<8x32xf32>
    %165 = arith.mulf %164, %163 : vector<8x32xf32>
    %cst_53 = arith.constant 5.000000e-01 : f32
    %166 = vector.broadcast %cst_53 : f32 to vector<8x32xf32>
    %167 = arith.addf %165, %166 : vector<8x32xf32>
    %168 = vector.extract_strided_slice %162 {offsets = [0, 32], sizes = [8, 32], strides = [1, 1]} : vector<8x128xf32> to vector<8x32xf32>
    %cst_54 = arith.constant 5.000000e-01 : f32
    %169 = vector.broadcast %cst_54 : f32 to vector<8x32xf32>
    %170 = arith.mulf %169, %168 : vector<8x32xf32>
    %cst_55 = arith.constant 5.000000e-01 : f32
    %171 = vector.broadcast %cst_55 : f32 to vector<8x32xf32>
    %172 = arith.addf %170, %171 : vector<8x32xf32>
    %173 = vector.extract_strided_slice %162 {offsets = [0, 64], sizes = [8, 32], strides = [1, 1]} : vector<8x128xf32> to vector<8x32xf32>
    %174 = vector.extract_strided_slice %162 {offsets = [0, 96], sizes = [8, 32], strides = [1, 1]} : vector<8x128xf32> to vector<8x32xf32>
    %cst_56 = arith.constant 5.000000e-01 : f32
    %175 = vector.broadcast %cst_56 : f32 to vector<8x32xf32>
    %176 = arith.mulf %175, %174 : vector<8x32xf32>
    %cst_57 = arith.constant 5.000000e-01 : f32
    %177 = vector.broadcast %cst_57 : f32 to vector<8x32xf32>
    %178 = arith.addf %176, %177 : vector<8x32xf32>
    %179 = arith.mulf %172, %156 : vector<8x32xf32>
    %180 = arith.mulf %167, %173 : vector<8x32xf32>
    %181 = arith.addf %179, %180 : vector<8x32xf32>
    %182 = math.tanh %181 : vector<8x32xf32>
    %183 = arith.mulf %178, %182 : vector<8x32xf32>
    %184 = vector.extract_strided_slice %5 {offsets = [56, 0], sizes = [8, 128], strides = [1, 1]} : vector<64x128xf32> to vector<8x128xf32>
    %cst_58 = arith.constant dense<0.000000e+00> : vector<8x128xf32>
    %185 = tpu.matmul %183, %6, %cst_58 {dimension_numbers = #tpu.dot_dimension_numbers<[1], [0], [0], [1], [0, 0, 1, 1], [], []>} : vector<8x32xf32>, vector<32x128xf32>, vector<8x128xf32> -> vector<8x128xf32>
    %186 = arith.addf %184, %185 : vector<8x128xf32>
    %187 = math.tanh %186 : vector<8x128xf32>
    %188 = vector.extract_strided_slice %187 {offsets = [0, 0], sizes = [8, 32], strides = [1, 1]} : vector<8x128xf32> to vector<8x32xf32>
    %cst_59 = arith.constant 5.000000e-01 : f32
    %189 = vector.broadcast %cst_59 : f32 to vector<8x32xf32>
    %190 = arith.mulf %189, %188 : vector<8x32xf32>
    %cst_60 = arith.constant 5.000000e-01 : f32
    %191 = vector.broadcast %cst_60 : f32 to vector<8x32xf32>
    %192 = arith.addf %190, %191 : vector<8x32xf32>
    %193 = vector.extract_strided_slice %187 {offsets = [0, 32], sizes = [8, 32], strides = [1, 1]} : vector<8x128xf32> to vector<8x32xf32>
    %cst_61 = arith.constant 5.000000e-01 : f32
    %194 = vector.broadcast %cst_61 : f32 to vector<8x32xf32>
    %195 = arith.mulf %194, %193 : vector<8x32xf32>
    %cst_62 = arith.constant 5.000000e-01 : f32
    %196 = vector.broadcast %cst_62 : f32 to vector<8x32xf32>
    %197 = arith.addf %195, %196 : vector<8x32xf32>
    %198 = vector.extract_strided_slice %187 {offsets = [0, 64], sizes = [8, 32], strides = [1, 1]} : vector<8x128xf32> to vector<8x32xf32>
    %199 = vector.extract_strided_slice %187 {offsets = [0, 96], sizes = [8, 32], strides = [1, 1]} : vector<8x128xf32> to vector<8x32xf32>
    %cst_63 = arith.constant 5.000000e-01 : f32
    %200 = vector.broadcast %cst_63 : f32 to vector<8x32xf32>
    %201 = arith.mulf %200, %199 : vector<8x32xf32>
    %cst_64 = arith.constant 5.000000e-01 : f32
    %202 = vector.broadcast %cst_64 : f32 to vector<8x32xf32>
    %203 = arith.addf %201, %202 : vector<8x32xf32>
    %204 = arith.mulf %197, %181 : vector<8x32xf32>
    %205 = arith.mulf %192, %198 : vector<8x32xf32>
    %206 = arith.addf %204, %205 : vector<8x32xf32>
    %207 = math.tanh %206 : vector<8x32xf32>
    %208 = arith.mulf %203, %207 : vector<8x32xf32>
    %c0_65 = arith.constant 0 : index
    %c0_66 = arith.constant 0 : index
    %209 = vector.load %arg4[%c0_65, %c0_66] : memref<32x32xf32, #tpu.memory_space<vmem>>, vector<32x32xf32>
    %cst_67 = arith.constant dense<0.000000e+00> : vector<8x32xf32>
    %210 = tpu.matmul %208, %209, %cst_67 {dimension_numbers = #tpu.dot_dimension_numbers<[1], [0], [0], [1], [0, 0, 1, 1], [], []>} : vector<8x32xf32>, vector<32x32xf32>, vector<8x32xf32> -> vector<8x32xf32>
    %c0_68 = arith.constant 0 : index
    %c0_69 = arith.constant 0 : index
    %211 = vector.load %arg5[%c0_68, %c0_69] : memref<1x32xf32, #tpu.memory_space<vmem>>, vector<1x32xf32>
    %212 = vector.broadcast %211 : vector<1x32xf32> to vector<8x32xf32>
    %213 = arith.addf %210, %212 : vector<8x32xf32>
    %cst_70 = arith.constant 0.000000e+00 : f32
    %214 = vector.broadcast %cst_70 : f32 to vector<8x32xf32>
    %215 = arith.maximumf %213, %214 : vector<8x32xf32>
    %c0_71 = arith.constant 0 : index
    %c0_72 = arith.constant 0 : index
    %216 = vector.load %arg6[%c0_71, %c0_72] : memref<32x64xf32, #tpu.memory_space<vmem>>, vector<32x64xf32>
    %cst_73 = arith.constant dense<0.000000e+00> : vector<8x64xf32>
    %217 = tpu.matmul %215, %216, %cst_73 {dimension_numbers = #tpu.dot_dimension_numbers<[1], [0], [0], [1], [0, 0, 1, 1], [], []>} : vector<8x32xf32>, vector<32x64xf32>, vector<8x64xf32> -> vector<8x64xf32>
    %c0_74 = arith.constant 0 : index
    %c0_75 = arith.constant 0 : index
    %218 = vector.load %arg7[%c0_74, %c0_75] : memref<1x64xf32, #tpu.memory_space<vmem>>, vector<1x64xf32>
    %219 = vector.broadcast %218 : vector<1x64xf32> to vector<8x64xf32>
    %220 = arith.addf %217, %219 : vector<8x64xf32>
    %cst_76 = arith.constant 0.000000e+00 : f32
    %221 = vector.broadcast %cst_76 : f32 to vector<8x64xf32>
    %222 = arith.maximumf %220, %221 : vector<8x64xf32>
    %c0_77 = arith.constant 0 : index
    %c0_78 = arith.constant 0 : index
    %223 = vector.load %arg8[%c0_77, %c0_78] : memref<64x32xf32, #tpu.memory_space<vmem>>, vector<64x32xf32>
    %cst_79 = arith.constant dense<0.000000e+00> : vector<8x32xf32>
    %224 = tpu.matmul %222, %223, %cst_79 {dimension_numbers = #tpu.dot_dimension_numbers<[1], [0], [0], [1], [0, 0, 1, 1], [], []>} : vector<8x64xf32>, vector<64x32xf32>, vector<8x32xf32> -> vector<8x32xf32>
    %c0_80 = arith.constant 0 : index
    %c0_81 = arith.constant 0 : index
    %225 = vector.load %arg9[%c0_80, %c0_81] : memref<1x32xf32, #tpu.memory_space<vmem>>, vector<1x32xf32>
    %226 = vector.broadcast %225 : vector<1x32xf32> to vector<8x32xf32>
    %227 = arith.addf %224, %226 : vector<8x32xf32>
    %cst_82 = arith.constant 0.000000e+00 : f32
    %228 = vector.broadcast %cst_82 : f32 to vector<8x32xf32>
    %229 = arith.maximumf %227, %228 : vector<8x32xf32>
    %c0_83 = arith.constant 0 : index
    %c0_84 = arith.constant 0 : index
    %230 = vector.load %arg10[%c0_83, %c0_84] : memref<32x128xf32, #tpu.memory_space<vmem>>, vector<32x128xf32>
    %cst_85 = arith.constant dense<0.000000e+00> : vector<8x128xf32>
    %231 = tpu.matmul %229, %230, %cst_85 {dimension_numbers = #tpu.dot_dimension_numbers<[1], [0], [0], [1], [0, 0, 1, 1], [], []>} : vector<8x32xf32>, vector<32x128xf32>, vector<8x128xf32> -> vector<8x128xf32>
    %c0_86 = arith.constant 0 : index
    %c0_87 = arith.constant 0 : index
    %232 = vector.load %arg11[%c0_86, %c0_87] : memref<1x128xf32, #tpu.memory_space<vmem>>, vector<1x128xf32>
    %233 = vector.broadcast %232 : vector<1x128xf32> to vector<8x128xf32>
    %234 = arith.addf %231, %233 : vector<8x128xf32>
    %c0_88 = arith.constant 0 : index
    %c0_89 = arith.constant 0 : index
    %235 = vector.load %arg12[%c0_88, %c0_89] : memref<8x128xf32, #tpu.memory_space<vmem>>, vector<8x128xf32>
    tpu.vector_store %arg12[%c0_88, %c0_89], %234 {strides = array<i32>} : memref<8x128xf32, #tpu.memory_space<vmem>>, vector<8x128xf32>,
    %c0_90 = arith.constant 0 : index
    %c0_91 = arith.constant 0 : index
    %236 = vector.load %arg12[%c0_90, %c0_91] : memref<8x128xf32, #tpu.memory_space<vmem>>, vector<8x32xf32>
    tpu.vector_store %arg12[%c0_90, %c0_91], %208 {strides = array<i32>} : memref<8x128xf32, #tpu.memory_space<vmem>>, vector<8x32xf32>,
    %c0_92 = arith.constant 0 : index
    %c32 = arith.constant 32 : index
    %237 = vector.load %arg12[%c0_92, %c32] : memref<8x128xf32, #tpu.memory_space<vmem>>, vector<8x32xf32>
    tpu.vector_store %arg12[%c0_92, %c32], %206 {strides = array<i32>} : memref<8x128xf32, #tpu.memory_space<vmem>>, vector<8x32xf32>,
    return
  }
}

</mosaic_0001>

<llo_original>
// kernel: lstm_value_forward.1
$region0: #{lstm_value_forward.1}
  #allocation0 [shape = 'u32[]', space=smem, size = 0x4, offset = 0x4, fixed_abs, tag = 'smem constant byte address 0x4 - core index']
  #allocation1 [shape = 'u32[72,128]{1,0:T(1,128)}', space=vmem, size = 0x9000, scoped, tag = 'internal scratch']
  %s0 = inlined_call_operand.vmem [shape: f32[64,16], index: 0, kind: input, shape index: {}]
  %s1 = inlined_call_operand.vmem [shape: f32[16,128], index: 1, kind: input, shape index: {}]
  %s2 = inlined_call_operand.vmem [shape: f32[32,128], index: 2, kind: input, shape index: {}]
  %s3 = inlined_call_operand.vmem [shape: f32[1,128], index: 3, kind: input, shape index: {}]
  %s4 = inlined_call_operand.vmem [shape: f32[32,32], index: 4, kind: input, shape index: {}]
  %s5 = inlined_call_operand.vmem [shape: f32[1,32], index: 5, kind: input, shape index: {}]
  %s6 = inlined_call_operand.vmem [shape: f32[32,64], index: 6, kind: input, shape index: {}]
  %s7 = inlined_call_operand.vmem [shape: f32[1,64], index: 7, kind: input, shape index: {}]
  %s8 = inlined_call_operand.vmem [shape: f32[64,32], index: 8, kind: input, shape index: {}]
  %s9 = inlined_call_operand.vmem [shape: f32[1,32], index: 9, kind: input, shape index: {}]
  %s10 = inlined_call_operand.vmem [shape: f32[32,128], index: 10, kind: input, shape index: {}]
  %s11 = inlined_call_operand.vmem [shape: f32[1,128], index: 11, kind: input, shape index: {}]
  %s12 = inlined_call_operand.vmem [shape: f32[8,128], index: 12, kind: output, shape index: {}]
  %s13 = sld [smem:[#allocation0]]
  $region58: #{lstm_value_forward.1} parent=0
    _
  %s15 = ssub.s32 1, %s13
  %s16 = scalar_select 0, %s15, %s13
  // Predicated region
  $region2: #{lstm_value_forward.1} parent=0 // pred_check
    _
  $region3: #{lstm_value_forward.1} parent=0 // pred_check_branch
    %18 = sbr.rel (0) target = $region5
  $region4: #{lstm_value_forward.1} parent=0 // pred_region
    _
  $region5: #{lstm_value_forward.1} parent=0 // pred_fallthru
    _
  // Predicated region
  $region6: #{lstm_value_forward.1} parent=0 // pred_check
    _
  $region7: #{lstm_value_forward.1} parent=0 // pred_check_branch
    %20 = sbr.rel (0) target = $region9
  $region8: #{lstm_value_forward.1} parent=0 // pred_region
    _
  $region9: #{lstm_value_forward.1} parent=0 // pred_fallthru
    _
  // Predicated region
  $region10: #{lstm_value_forward.1} parent=0 // pred_check
    _
  $region11: #{lstm_value_forward.1} parent=0 // pred_check_branch
    %22 = sbr.rel (0) target = $region13
  $region12: #{lstm_value_forward.1} parent=0 // pred_region
    _
  $region13: #{lstm_value_forward.1} parent=0 // pred_fallthru
    _
  // Predicated region
  $region14: #{lstm_value_forward.1} parent=0 // pred_check
    _
  $region15: #{lstm_value_forward.1} parent=0 // pred_check_branch
    %24 = sbr.rel (0) target = $region17
  $region16: #{lstm_value_forward.1} parent=0 // pred_region
    _
  $region17: #{lstm_value_forward.1} parent=0 // pred_fallthru
    _
  // Predicated region
  $region18: #{lstm_value_forward.1} parent=0 // pred_check
    _
  $region19: #{lstm_value_forward.1} parent=0 // pred_check_branch
    %26 = sbr.rel (0) target = $region21
  $region20: #{lstm_value_forward.1} parent=0 // pred_region
    _
  $region21: #{lstm_value_forward.1} parent=0 // pred_fallthru
    _
  // Predicated region
  $region22: #{lstm_value_forward.1} parent=0 // pred_check
    _
  $region23: #{lstm_value_forward.1} parent=0 // pred_check_branch
    %28 = sbr.rel (0) target = $region25
  $region24: #{lstm_value_forward.1} parent=0 // pred_region
    _
  $region25: #{lstm_value_forward.1} parent=0 // pred_fallthru
    _
  // Predicated region
  $region26: #{lstm_value_forward.1} parent=0 // pred_check
    _
  $region27: #{lstm_value_forward.1} parent=0 // pred_check_branch
    %30 = sbr.rel (0) target = $region29
  $region28: #{lstm_value_forward.1} parent=0 // pred_region
    _
  $region29: #{lstm_value_forward.1} parent=0 // pred_fallthru
    _
  // Predicated region
  $region30: #{lstm_value_forward.1} parent=0 // pred_check
    _
  $region31: #{lstm_value_forward.1} parent=0 // pred_check_branch
    %32 = sbr.rel (0) target = $region33
  $region32: #{lstm_value_forward.1} parent=0 // pred_region
    _
  $region33: #{lstm_value_forward.1} parent=0 // pred_fallthru
    _
  // Predicated region
  $region34: #{lstm_value_forward.1} parent=0 // pred_check
    _
  $region35: #{lstm_value_forward.1} parent=0 // pred_check_branch
    %34 = sbr.rel (0) target = $region37
  $region36: #{lstm_value_forward.1} parent=0 // pred_region
    _
  $region37: #{lstm_value_forward.1} parent=0 // pred_fallthru
    _
  // Predicated region
  $region38: #{lstm_value_forward.1} parent=0 // pred_check
    _
  $region39: #{lstm_value_forward.1} parent=0 // pred_check_branch
    %36 = sbr.rel (0) target = $region41
  $region40: #{lstm_value_forward.1} parent=0 // pred_region
    _
  $region41: #{lstm_value_forward.1} parent=0 // pred_fallthru
    _
  // Predicated region
  $region42: #{lstm_value_forward.1} parent=0 // pred_check
    _
  $region43: #{lstm_value_forward.1} parent=0 // pred_check_branch
    %38 = sbr.rel (0) target = $region45
  $region44: #{lstm_value_forward.1} parent=0 // pred_region
    _
  $region45: #{lstm_value_forward.1} parent=0 // pred_fallthru
    _
  // Predicated region
  $region46: #{lstm_value_forward.1} parent=0 // pred_check
    _
  $region47: #{lstm_value_forward.1} parent=0 // pred_check_branch
    %40 = sbr.rel (0) target = $region49
  $region48: #{lstm_value_forward.1} parent=0 // pred_region
    _
  $region49: #{lstm_value_forward.1} parent=0 // pred_fallthru
    _
  %v41 = vld [vmem:[%s0] sm:$0xff]
  %v42 = vld [vmem:[%s0 + $0x8] sm:$0xff]
  %v43 = vld [vmem:[%s0 + $0x10] sm:$0xff]
  %v44 = vld [vmem:[%s0 + $0x18] sm:$0xff]
  %v45 = vld [vmem:[%s0 + $0x20] sm:$0xff]
  %v46 = vld [vmem:[%s0 + $0x28] sm:$0xff]
  %v47 = vld [vmem:[%s0 + $0x30] sm:$0xff]
  %v48 = vld [vmem:[%s0 + $0x38] sm:$0xff]
  %v49 = vld [vmem:[%s1] sm:$0xff]
  %v50 = vld [vmem:[%s1 + $0x8] sm:$0xff]
  %v51 = vld [vmem:[%s3] sm:$0x1]
  %v53 = vperm.slane %v51, 0
  %vm55 = vcmask 130048
  %v57 = vsel %vm55, %v41, 0
  %v60 = vsel %vm55, %v42, 0
  %v63 = vsel %vm55, %v43, 0
  %v66 = vsel %vm55, %v44, 0
  %v69 = vsel %vm55, %v45, 0
  %v72 = vsel %vm55, %v46, 0
  %v75 = vsel %vm55, %v47, 0
  %v78 = vsel %vm55, %v48, 0
  %80 = vmatpush.msra.mxu0 0.0
  %81 = vmatpush.msra.mxu0 0.0
  %82 = vmatpush.msra.mxu0 0.0
  %83 = vmatpush.msra.mxu0 0.0
  %84 = vmatpush.msra.mxu0 0.0
  %85 = vmatpush.msra.mxu0 0.0
  %86 = vmatpush.msra.mxu0 0.0
  %87 = vmatpush.msra.mxu0 0.0
  %88 = vmatpush.msra.mxu0 0.0
  %89 = vmatpush.msra.mxu0 0.0
  %90 = vmatpush.msra.mxu0 0.0
  %91 = vmatpush.msra.mxu0 0.0
  %92 = vmatpush.msra.mxu0 0.0
  %93 = vmatpush.msra.mxu0 0.0
  %94 = vmatpush.msra.mxu0 %v50
  %95 = vmatpush.msra.mxu0 %v49
  %96 = vmatmul.f32.gmra.mxu0 %v57
  %v97 = vpop.f32.mrf.mxu0
  %v98 = vadd.f32 %v53, %v97
  %99 = vmatmul.f32.gmra.mxu0 %v60
  %v100 = vpop.f32.mrf.mxu0
  %v101 = vadd.f32 %v53, %v100
  %102 = vmatmul.f32.gmra.mxu0 %v63
  %v103 = vpop.f32.mrf.mxu0
  %v104 = vadd.f32 %v53, %v103
  %105 = vmatmul.f32.gmra.mxu0 %v66
  %v106 = vpop.f32.mrf.mxu0
  %v107 = vadd.f32 %v53, %v106
  %108 = vmatmul.f32.gmra.mxu0 %v69
  %v109 = vpop.f32.mrf.mxu0
  %v110 = vadd.f32 %v53, %v109
  %111 = vmatmul.f32.gmra.mxu0 %v72
  %v112 = vpop.f32.mrf.mxu0
  %v113 = vadd.f32 %v53, %v112
  %114 = vmatmul.f32.gmra.mxu0 %v75
  %v115 = vpop.f32.mrf.mxu0
  %v116 = vadd.f32 %v53, %v115
  %117 = vmatmul.f32.gmra.mxu0 %v78
  %v118 = vpop.f32.mrf.mxu0
  %v119 = vadd.f32 %v53, %v118
  %120 = vdwg.mxu0
  %v121 = vld [vmem:[%s2] sm:$0xff]
  %v122 = vld [vmem:[%s2 + $0x8] sm:$0xff]
  %v123 = vld [vmem:[%s2 + $0x10] sm:$0xff]
  %v124 = vld [vmem:[%s2 + $0x18] sm:$0xff]
  %vm125 = vcmask 261120
  %v127 = vsel %vm125, 0.0, 0
  %129 = vmatpush.msra.mxu0 0.0
  %130 = vmatpush.msra.mxu0 0.0
  %131 = vmatpush.msra.mxu0 0.0
  %132 = vmatpush.msra.mxu0 0.0
  %133 = vmatpush.msra.mxu0 0.0
  %134 = vmatpush.msra.mxu0 0.0
  %135 = vmatpush.msra.mxu0 0.0
  %136 = vmatpush.msra.mxu0 0.0
  %137 = vmatpush.msra.mxu0 0.0
  %138 = vmatpush.msra.mxu0 0.0
  %139 = vmatpush.msra.mxu0 0.0
  %140 = vmatpush.msra.mxu0 0.0
  %141 = vmatpush.msra.mxu0 %v124
  %142 = vmatpush.msra.mxu0 %v123
  %143 = vmatpush.msra.mxu0 %v122
  %144 = vmatpush.msra.mxu0 %v121
  %145 = vmatmul.f32.gmra.mxu0 %v127
  %v146 = vpop.f32.mrf.mxu0
  %v147 = vadd.f32 0.0, %v146
  %148 = vdwg.mxu0
  %v149 = vadd.f32 %v98, %v147
  %v150 = vtanh.pop %v149
  %v151 = vmul.f32 %v150, 0.5
  %v152 = vadd.f32 %v151, 0.5
  %v153 = vmul.f32 %v152, 0.0
  %155 = vrot.lane.b32.xlu0 %v150, 64
  %v156 = vpop.permute.xlu0 %155
  %v158 = vmul.f32 %v152, %v156
  %160 = vrot.lane.b32.xlu0 %v158, 32
  %v161 = vpop.permute.xlu0 %160
  %v163 = vadd.f32 %v153, %v161
  %v164 = vtanh.pop %v163
  %166 = vrot.lane.b32.xlu0 %v164, 64
  %v167 = vpop.permute.xlu0 %166
  %v169 = vmul.f32 %v152, %v167
  %171 = vrot.lane.b32.xlu0 %v169, 32
  %v172 = vpop.permute.xlu0 %171
  %v173 = vsel %vm125, %v172, 0
  %175 = vmatpush.msra.mxu0 0.0
  %176 = vmatpush.msra.mxu0 0.0
  %177 = vmatpush.msra.mxu0 0.0
  %178 = vmatpush.msra.mxu0 0.0
  %179 = vmatpush.msra.mxu0 0.0
  %180 = vmatpush.msra.mxu0 0.0
  %181 = vmatpush.msra.mxu0 0.0
  %182 = vmatpush.msra.mxu0 0.0
  %183 = vmatpush.msra.mxu0 0.0
  %184 = vmatpush.msra.mxu0 0.0
  %185 = vmatpush.msra.mxu0 0.0
  %186 = vmatpush.msra.mxu0 0.0
  %187 = vmatpush.msra.mxu0 %v124
  %188 = vmatpush.msra.mxu0 %v123
  %189 = vmatpush.msra.mxu0 %v122
  %190 = vmatpush.msra.mxu0 %v121
  %191 = vmatmul.f32.gmra.mxu0 %v173
  %v192 = vpop.f32.mrf.mxu0
  %v193 = vadd.f32 0.0, %v192
  %194 = vdwg.mxu0
  %v195 = vadd.f32 %v101, %v193
  %v196 = vtanh.pop %v195
  %v197 = vmul.f32 %v196, 0.5
  %v198 = vadd.f32 %v197, 0.5
  %v199 = vmul.f32 %v198, %v163
  %201 = vrot.lane.b32.xlu0 %v196, 64
  %v202 = vpop.permute.xlu0 %201
  %v204 = vmul.f32 %v198, %v202
  %206 = vrot.lane.b32.xlu0 %v204, 32
  %v207 = vpop.permute.xlu0 %206
  %v209 = vadd.f32 %v199, %v207
  %v210 = vtanh.pop %v209
  %212 = vrot.lane.b32.xlu0 %v210, 64
  %v213 = vpop.permute.xlu0 %212
  %v215 = vmul.f32 %v198, %v213
  %217 = vrot.lane.b32.xlu0 %v215, 32
  %v218 = vpop.permute.xlu0 %217
  %v219 = vsel %vm125, %v218, 0
  %221 = vmatpush.msra.mxu0 0.0
  %222 = vmatpush.msra.mxu0 0.0
  %223 = vmatpush.msra.mxu0 0.0
  %224 = vmatpush.msra.mxu0 0.0
  %225 = vmatpush.msra.mxu0 0.0
  %226 = vmatpush.msra.mxu0 0.0
  %227 = vmatpush.msra.mxu0 0.0
  %228 = vmatpush.msra.mxu0 0.0
  %229 = vmatpush.msra.mxu0 0.0
  %230 = vmatpush.msra.mxu0 0.0
  %231 = vmatpush.msra.mxu0 0.0
  %232 = vmatpush.msra.mxu0 0.0
  %233 = vmatpush.msra.mxu0 %v124
  %234 = vmatpush.msra.mxu0 %v123
  %235 = vmatpush.msra.mxu0 %v122
  %236 = vmatpush.msra.mxu0 %v121
  %237 = vmatmul.f32.gmra.mxu0 %v219
  %v238 = vpop.f32.mrf.mxu0
  %v239 = vadd.f32 0.0, %v238
  %240 = vdwg.mxu0
  %v241 = vadd.f32 %v104, %v239
  %v242 = vtanh.pop %v241
  %v243 = vmul.f32 %v242, 0.5
  %v244 = vadd.f32 %v243, 0.5
  %v245 = vmul.f32 %v244, %v209
  %247 = vrot.lane.b32.xlu0 %v242, 64
  %v248 = vpop.permute.xlu0 %247
  %v250 = vmul.f32 %v244, %v248
  %252 = vrot.lane.b32.xlu0 %v250, 32
  %v253 = vpop.permute.xlu0 %252
  %v255 = vadd.f32 %v245, %v253
  %v256 = vtanh.pop %v255
  %258 = vrot.lane.b32.xlu0 %v256, 64
  %v259 = vpop.permute.xlu0 %258
  %v261 = vmul.f32 %v244, %v259
  %263 = vrot.lane.b32.xlu0 %v261, 32
  %v264 = vpop.permute.xlu0 %263
  %v265 = vsel %vm125, %v264, 0
  %267 = vmatpush.msra.mxu0 0.0
  %268 = vmatpush.msra.mxu0 0.0
  %269 = vmatpush.msra.mxu0 0.0
  %270 = vmatpush.msra.mxu0 0.0
  %271 = vmatpush.msra.mxu0 0.0
  %272 = vmatpush.msra.mxu0 0.0
  %273 = vmatpush.msra.mxu0 0.0
  %274 = vmatpush.msra.mxu0 0.0
  %275 = vmatpush.msra.mxu0 0.0
  %276 = vmatpush.msra.mxu0 0.0
  %277 = vmatpush.msra.mxu0 0.0
  %278 = vmatpush.msra.mxu0 0.0
  %279 = vmatpush.msra.mxu0 %v124
  %280 = vmatpush.msra.mxu0 %v123
  %281 = vmatpush.msra.mxu0 %v122
  %282 = vmatpush.msra.mxu0 %v121
  %283 = vmatmul.f32.gmra.mxu0 %v265
  %v284 = vpop.f32.mrf.mxu0
  %v285 = vadd.f32 0.0, %v284
  %286 = vdwg.mxu0
  %v287 = vadd.f32 %v107, %v285
  %v288 = vtanh.pop %v287
  %v289 = vmul.f32 %v288, 0.5
  %v290 = vadd.f32 %v289, 0.5
  %v291 = vmul.f32 %v290, %v255
  %293 = vrot.lane.b32.xlu0 %v288, 64
  %v294 = vpop.permute.xlu0 %293
  %v296 = vmul.f32 %v290, %v294
  %298 = vrot.lane.b32.xlu0 %v296, 32
  %v299 = vpop.permute.xlu0 %298
  %v301 = vadd.f32 %v291, %v299
  %v302 = vtanh.pop %v301
  %304 = vrot.lane.b32.xlu0 %v302, 64
  %v305 = vpop.permute.xlu0 %304
  %v307 = vmul.f32 %v290, %v305
  %309 = vrot.lane.b32.xlu0 %v307, 32
  %v310 = vpop.permute.xlu0 %309
  %v311 = vsel %vm125, %v310, 0
  %313 = vmatpush.msra.mxu0 0.0
  %314 = vmatpush.msra.mxu0 0.0
  %315 = vmatpush.msra.mxu0 0.0
  %316 = vmatpush.msra.mxu0 0.0
  %317 = vmatpush.msra.mxu0 0.0
  %318 = vmatpush.msra.mxu0 0.0
  %319 = vmatpush.msra.mxu0 0.0
  %320 = vmatpush.msra.mxu0 0.0
  %321 = vmatpush.msra.mxu0 0.0
  %322 = vmatpush.msra.mxu0 0.0
  %323 = vmatpush.msra.mxu0 0.0
  %324 = vmatpush.msra.mxu0 0.0
  %325 = vmatpush.msra.mxu0 %v124
  %326 = vmatpush.msra.mxu0 %v123
  %327 = vmatpush.msra.mxu0 %v122
  %328 = vmatpush.msra.mxu0 %v121
  %329 = vmatmul.f32.gmra.mxu0 %v311
  %v330 = vpop.f32.mrf.mxu0
  %v331 = vadd.f32 0.0, %v330
  %332 = vdwg.mxu0
  %v333 = vadd.f32 %v110, %v331
  %v334 = vtanh.pop %v333
  %v335 = vmul.f32 %v334, 0.5
  %v336 = vadd.f32 %v335, 0.5
  %v337 = vmul.f32 %v336, %v301
  %339 = vrot.lane.b32.xlu0 %v334, 64
  %v340 = vpop.permute.xlu0 %339
  %v342 = vmul.f32 %v336, %v340
  %344 = vrot.lane.b32.xlu0 %v342, 32
  %v345 = vpop.permute.xlu0 %344
  %v347 = vadd.f32 %v337, %v345
  %v348 = vtanh.pop %v347
  %350 = vrot.lane.b32.xlu0 %v348, 64
  %v351 = vpop.permute.xlu0 %350
  %v353 = vmul.f32 %v336, %v351
  %355 = vrot.lane.b32.xlu0 %v353, 32
  %v356 = vpop.permute.xlu0 %355
  %v357 = vsel %vm125, %v356, 0
  %359 = vmatpush.msra.mxu0 0.0
  %360 = vmatpush.msra.mxu0 0.0
  %361 = vmatpush.msra.mxu0 0.0
  %362 = vmatpush.msra.mxu0 0.0
  %363 = vmatpush.msra.mxu0 0.0
  %364 = vmatpush.msra.mxu0 0.0
  %365 = vmatpush.msra.mxu0 0.0
  %366 = vmatpush.msra.mxu0 0.0
  %367 = vmatpush.msra.mxu0 0.0
  %368 = vmatpush.msra.mxu0 0.0
  %369 = vmatpush.msra.mxu0 0.0
  %370 = vmatpush.msra.mxu0 0.0
  %371 = vmatpush.msra.mxu0 %v124
  %372 = vmatpush.msra.mxu0 %v123
  %373 = vmatpush.msra.mxu0 %v122
  %374 = vmatpush.msra.mxu0 %v121
  %375 = vmatmul.f32.gmra.mxu0 %v357
  %v376 = vpop.f32.mrf.mxu0
  %v377 = vadd.f32 0.0, %v376
  %378 = vdwg.mxu0
  %v379 = vadd.f32 %v113, %v377
  %v380 = vtanh.pop %v379
  %v381 = vmul.f32 %v380, 0.5
  %v382 = vadd.f32 %v381, 0.5
  %v383 = vmul.f32 %v382, %v347
  %385 = vrot.lane.b32.xlu0 %v380, 64
  %v386 = vpop.permute.xlu0 %385
  %v388 = vmul.f32 %v382, %v386
  %390 = vrot.lane.b32.xlu0 %v388, 32
  %v391 = vpop.permute.xlu0 %390
  %v393 = vadd.f32 %v383, %v391
  %v394 = vtanh.pop %v393
  %396 = vrot.lane.b32.xlu0 %v394, 64
  %v397 = vpop.permute.xlu0 %396
  %v399 = vmul.f32 %v382, %v397
  %401 = vrot.lane.b32.xlu0 %v399, 32
  %v402 = vpop.permute.xlu0 %401
  %v403 = vsel %vm125, %v402, 0
  %405 = vmatpush.msra.mxu0 0.0
  %406 = vmatpush.msra.mxu0 0.0
  %407 = vmatpush.msra.mxu0 0.0
  %408 = vmatpush.msra.mxu0 0.0
  %409 = vmatpush.msra.mxu0 0.0
  %410 = vmatpush.msra.mxu0 0.0
  %411 = vmatpush.msra.mxu0 0.0
  %412 = vmatpush.msra.mxu0 0.0
  %413 = vmatpush.msra.mxu0 0.0
  %414 = vmatpush.msra.mxu0 0.0
  %415 = vmatpush.msra.mxu0 0.0
  %416 = vmatpush.msra.mxu0 0.0
  %417 = vmatpush.msra.mxu0 %v124
  %418 = vmatpush.msra.mxu0 %v123
  %419 = vmatpush.msra.mxu0 %v122
  %420 = vmatpush.msra.mxu0 %v121
  %421 = vmatmul.f32.gmra.mxu0 %v403
  %v422 = vpop.f32.mrf.mxu0
  %v423 = vadd.f32 0.0, %v422
  %424 = vdwg.mxu0
  %v425 = vadd.f32 %v116, %v423
  %v426 = vtanh.pop %v425
  %v427 = vmul.f32 %v426, 0.5
  %v428 = vadd.f32 %v427, 0.5
  %v429 = vmul.f32 %v428, %v393
  %431 = vrot.lane.b32.xlu0 %v426, 64
  %v432 = vpop.permute.xlu0 %431
  %v434 = vmul.f32 %v428, %v432
  %436 = vrot.lane.b32.xlu0 %v434, 32
  %v437 = vpop.permute.xlu0 %436
  %v439 = vadd.f32 %v429, %v437
  %v440 = vtanh.pop %v439
  %442 = vrot.lane.b32.xlu0 %v440, 64
  %v443 = vpop.permute.xlu0 %442
  %v445 = vmul.f32 %v428, %v443
  %447 = vrot.lane.b32.xlu0 %v445, 32
  %v448 = vpop.permute.xlu0 %447
  %v449 = vsel %vm125, %v448, 0
  %451 = vmatpush.msra.mxu0 0.0
  %452 = vmatpush.msra.mxu0 0.0
  %453 = vmatpush.msra.mxu0 0.0
  %454 = vmatpush.msra.mxu0 0.0
  %455 = vmatpush.msra.mxu0 0.0
  %456 = vmatpush.msra.mxu0 0.0
  %457 = vmatpush.msra.mxu0 0.0
  %458 = vmatpush.msra.mxu0 0.0
  %459 = vmatpush.msra.mxu0 0.0
  %460 = vmatpush.msra.mxu0 0.0
  %461 = vmatpush.msra.mxu0 0.0
  %462 = vmatpush.msra.mxu0 0.0
  %463 = vmatpush.msra.mxu0 %v124
  %464 = vmatpush.msra.mxu0 %v123
  %465 = vmatpush.msra.mxu0 %v122
  %466 = vmatpush.msra.mxu0 %v121
  %467 = vmatmul.f32.gmra.mxu0 %v449
  %v468 = vpop.f32.mrf.mxu0
  %v469 = vadd.f32 0.0, %v468
  %470 = vdwg.mxu0
  %v471 = vadd.f32 %v119, %v469
  %v472 = vtanh.pop %v471
  %v473 = vmul.f32 %v472, 0.5
  %v474 = vadd.f32 %v473, 0.5
  %v475 = vmul.f32 %v474, %v439
  %477 = vrot.lane.b32.xlu0 %v472, 64
  %v478 = vpop.permute.xlu0 %477
  %v480 = vmul.f32 %v474, %v478
  %482 = vrot.lane.b32.xlu0 %v480, 32
  %v483 = vpop.permute.xlu0 %482
  %v485 = vadd.f32 %v475, %v483
  %v486 = vtanh.pop %v485
  %488 = vrot.lane.b32.xlu0 %v486, 64
  %v489 = vpop.permute.xlu0 %488
  %v491 = vmul.f32 %v474, %v489
  %v492 = vld [vmem:[%s4] sm:$0xff]
  %v493 = vld [vmem:[%s4 + $0x8] sm:$0xff]
  %v494 = vld [vmem:[%s4 + $0x10] sm:$0xff]
  %v495 = vld [vmem:[%s4 + $0x18] sm:$0xff]
  %v496 = vld [vmem:[%s5] sm:$0x1]
  %v498 = vperm.slane %v496, 0
  %501 = vrot.lane.b32.xlu0 %v491, 32
  %v502 = vpop.permute.xlu0 %501
  %v503 = vsel %vm125, %v502, 0
  %505 = vmatpush.msra.mxu0 0.0
  %506 = vmatpush.msra.mxu0 0.0
  %507 = vmatpush.msra.mxu0 0.0
  %508 = vmatpush.msra.mxu0 0.0
  %509 = vmatpush.msra.mxu0 0.0
  %510 = vmatpush.msra.mxu0 0.0
  %511 = vmatpush.msra.mxu0 0.0
  %512 = vmatpush.msra.mxu0 0.0
  %513 = vmatpush.msra.mxu0 0.0
  %514 = vmatpush.msra.mxu0 0.0
  %515 = vmatpush.msra.mxu0 0.0
  %516 = vmatpush.msra.mxu0 0.0
  %517 = vmatpush.msra.mxu0 %v495
  %518 = vmatpush.msra.mxu0 %v494
  %519 = vmatpush.msra.mxu0 %v493
  %520 = vmatpush.msra.mxu0 %v492
  %521 = vmatmul.f32.gmra.mxu0 %v503
  %v522 = vpop.f32.mrf.mxu0
  %v523 = vadd.f32 %v498, %v522
  %524 = vdwg.mxu0
  %v525 = vmax.f32 %v523, 0.0
  %v526 = vld [vmem:[%s6] sm:$0xff]
  %v527 = vld [vmem:[%s6 + $0x8] sm:$0xff]
  %v528 = vld [vmem:[%s6 + $0x10] sm:$0xff]
  %v529 = vld [vmem:[%s6 + $0x18] sm:$0xff]
  %v530 = vld [vmem:[%s7] sm:$0x1]
  %v532 = vperm.slane %v530, 0
  %v535 = vsel %vm125, %v525, 0
  %537 = vmatpush.msra.mxu0 0.0
  %538 = vmatpush.msra.mxu0 0.0
  %539 = vmatpush.msra.mxu0 0.0
  %540 = vmatpush.msra.mxu0 0.0
  %541 = vmatpush.msra.mxu0 0.0
  %542 = vmatpush.msra.mxu0 0.0
  %543 = vmatpush.msra.mxu0 0.0
  %544 = vmatpush.msra.mxu0 0.0
  %545 = vmatpush.msra.mxu0 0.0
  %546 = vmatpush.msra.mxu0 0.0
  %547 = vmatpush.msra.mxu0 0.0
  %548 = vmatpush.msra.mxu0 0.0
  %549 = vmatpush.msra.mxu0 %v529
  %550 = vmatpush.msra.mxu0 %v528
  %551 = vmatpush.msra.mxu0 %v527
  %552 = vmatpush.msra.mxu0 %v526
  %553 = vmatmul.f32.gmra.mxu0 %v535
  %v554 = vpop.f32.mrf.mxu0
  %v555 = vadd.f32 %v532, %v554
  %556 = vdwg.mxu0
  %v557 = vmax.f32 %v555, 0.0
  %v558 = vld [vmem:[%s8] sm:$0xff]
  %v559 = vld [vmem:[%s8 + $0x8] sm:$0xff]
  %v560 = vld [vmem:[%s8 + $0x10] sm:$0xff]
  %v561 = vld [vmem:[%s8 + $0x18] sm:$0xff]
  %v562 = vld [vmem:[%s8 + $0x20] sm:$0xff]
  %v563 = vld [vmem:[%s8 + $0x28] sm:$0xff]
  %v564 = vld [vmem:[%s8 + $0x30] sm:$0xff]
  %v565 = vld [vmem:[%s8 + $0x38] sm:$0xff]
  %v566 = vld [vmem:[%s9] sm:$0x1]
  %v568 = vperm.slane %v566, 0
  %vm570 = vcmask 523264
  %v572 = vsel %vm570, %v557, 0
  %574 = vmatpush.msra.mxu0 0.0
  %575 = vmatpush.msra.mxu0 0.0
  %576 = vmatpush.msra.mxu0 0.0
  %577 = vmatpush.msra.mxu0 0.0
  %578 = vmatpush.msra.mxu0 0.0
  %579 = vmatpush.msra.mxu0 0.0
  %580 = vmatpush.msra.mxu0 0.0
  %581 = vmatpush.msra.mxu0 0.0
  %582 = vmatpush.msra.mxu0 %v565
  %583 = vmatpush.msra.mxu0 %v564
  %584 = vmatpush.msra.mxu0 %v563
  %585 = vmatpush.msra.mxu0 %v562
  %586 = vmatpush.msra.mxu0 %v561
  %587 = vmatpush.msra.mxu0 %v560
  %588 = vmatpush.msra.mxu0 %v559
  %589 = vmatpush.msra.mxu0 %v558
  %590 = vmatmul.f32.gmra.mxu0 %v572
  %v591 = vpop.f32.mrf.mxu0
  %v592 = vadd.f32 %v568, %v591
  %593 = vdwg.mxu0
  %v594 = vmax.f32 %v592, 0.0
  %v595 = vld [vmem:[%s10] sm:$0xff]
  %v596 = vld [vmem:[%s10 + $0x8] sm:$0xff]
  %v597 = vld [vmem:[%s10 + $0x10] sm:$0xff]
  %v598 = vld [vmem:[%s10 + $0x18] sm:$0xff]
  %v599 = vld [vmem:[%s11] sm:$0x1]
  %v601 = vperm.slane %v599, 0
  %v604 = vsel %vm125, %v594, 0
  %606 = vmatpush.msra.mxu0 0.0
  %607 = vmatpush.msra.mxu0 0.0
  %608 = vmatpush.msra.mxu0 0.0
  %609 = vmatpush.msra.mxu0 0.0
  %610 = vmatpush.msra.mxu0 0.0
  %611 = vmatpush.msra.mxu0 0.0
  %612 = vmatpush.msra.mxu0 0.0
  %613 = vmatpush.msra.mxu0 0.0
  %614 = vmatpush.msra.mxu0 0.0
  %615 = vmatpush.msra.mxu0 0.0
  %616 = vmatpush.msra.mxu0 0.0
  %617 = vmatpush.msra.mxu0 0.0
  %618 = vmatpush.msra.mxu0 %v598
  %619 = vmatpush.msra.mxu0 %v597
  %620 = vmatpush.msra.mxu0 %v596
  %621 = vmatpush.msra.mxu0 %v595
  %622 = vmatmul.f32.gmra.mxu0 %v604
  %v623 = vpop.f32.mrf.mxu0
  %v624 = vadd.f32 %v601, %v623
  %625 = vdwg.mxu0
  %626 = vst [vmem:[%s12] sm:$0xff] %v624
  %628 = vst.msk [vmem:[%s12] sm:$0xff] %vm125, %v502
  %vm629 = vcmask 523520
  %630 = vst.msk [vmem:[%s12] sm:$0xff] %vm629, %v485
  // Predicated region
  $region50: #{lstm_value_forward.1} parent=0 // pred_check
    _
  $region51: #{lstm_value_forward.1} parent=0 // pred_check_branch
    %632 = sbr.rel (0) target = $region53
  $region52: #{lstm_value_forward.1} parent=0 // pred_region
    _
  $region53: #{lstm_value_forward.1} parent=0 // pred_fallthru
    _
  // Predicated region
  $region54: #{lstm_value_forward.1} parent=0 // pred_check
    _
  $region55: #{lstm_value_forward.1} parent=0 // pred_check_branch
    %634 = sbr.rel (0) target = $region57
  $region56: #{lstm_value_forward.1} parent=0 // pred_region
    _
  $region57: #{lstm_value_forward.1} parent=0 // pred_fallthru
    _

</llo_original>
